<compile_context>
chip_gen: v5e
topology: v5e:2x2
jax: 0.10.0
libtpu: 0.0.40
codegen_flags: <defaults>
</compile_context>

<pallas_src>
import functools

import jax
import jax.numpy as jnp
from jax.experimental import pallas as pl
from jax.experimental.pallas import tpu as pltpu


# murmur3 fmix32 / golden-ratio constants expressed as in-range signed int32.
_GOLD = 0x9E3779B9 - (1 << 32)
_M1 = 0x85EBCA6B - (1 << 32)
_M2 = 0xC2B2AE35 - (1 << 32)

_TARGET_BLOCK_BYTES = 2 * 1024 * 1024      # ~2 MiB per block (85%+ roofline)
_VMEM_LIMIT_BYTES = 32 * 1024 * 1024       # safe on v5e/v6e/v7x


def _lrs32(z, k: int):
    """Logical right shift of an int32 array (arithmetic shift + mask)."""
    return (z >> k) & ((1 << (32 - k)) - 1)


def _stable_dropout_kernel(seed_ref, x_ref, o_ref, *, threshold31: int,
                           scale: float, row_tile: int, cols: int):
    """One (row_tile, cols) tile of inverted dropout with a hashed keep-mask."""
    i = pl.program_id(0)

    # Global element index for every lane/sublane slot of this tile (int32;
    # wraparound for >2^31 elements only perturbs the hash stream).
    row = jax.lax.broadcasted_iota(jnp.int32, (row_tile, cols), 0)
    col = jax.lax.broadcasted_iota(jnp.int32, (row_tile, cols), 1)
    idx = i * (row_tile * cols) + row * cols + col

    # Counter-based hash: murmur3 fmix32 of (index + seed * golden).
    z = idx + seed_ref[0] * jnp.int32(_GOLD)
    z = (z ^ _lrs32(z, 16)) * jnp.int32(_M1)
    z = (z ^ _lrs32(z, 13)) * jnp.int32(_M2)
    z = z ^ _lrs32(z, 16)
    r = z & jnp.int32(0x7FFFFFFF)              # uniform in [0, 2^31)

    keep = r >= jnp.int32(threshold31)         # dropped with prob ~= drop_prob
    x = x_ref[...]
    # Compute in the input dtype (no f32 upcast): matches torch semantics and
    # keeps bf16 inputs in bf16 vregs.
    o_ref[...] = jnp.where(keep, x * jnp.asarray(scale, x.dtype),
                           jnp.zeros_like(x))


def _choose_2d(n_elems: int, last_dim: int):
    """Pick a lane-dense 2-D layout (rows, cols), cols a big multiple of 128."""
    for c in (16384, 8192, 4096, 2048, 1024, 512, 256, 128):
        if n_elems % c == 0:
            return n_elems // c, c
    return n_elems // last_dim, last_dim       # fallback: keep hidden as lanes


def _choose_row_tile(rows: int, cols: int, itemsize: int):
    """Largest row tile (multiple of 8, or full extent) near the byte target."""
    bytes_per_row = max(1, cols * itemsize)
    tr = max(1, _TARGET_BLOCK_BYTES // bytes_per_row)
    if tr >= rows:
        return rows
    return min(rows, max(8, (tr // 8) * 8))


def stable_dropout(x, drop_prob: float, seed: int, *, training: bool = True):
    """Forward pass of StableDropout (inverted dropout, mask-and-scale)."""
    if not training or drop_prob <= 0.0:
        return x                                # eval / p == 0: identity

    orig_shape = x.shape
    n = x.size
    rows, cols = _choose_2d(n, orig_shape[-1])
    x2d = x.reshape(rows, cols)

    row_tile = _choose_row_tile(rows, cols, x2d.dtype.itemsize)
    grid = (pl.cdiv(rows, row_tile),)

    threshold31 = min((1 << 31) - 1, int(round(float(drop_prob) * (1 << 31))))
    scale = 1.0 / (1.0 - float(drop_prob))

    kernel = functools.partial(
        _stable_dropout_kernel, threshold31=threshold31, scale=scale,
        row_tile=row_tile, cols=cols)

    seed_arr = jnp.asarray([seed], dtype=jnp.int32)

    grid_spec = pltpu.PrefetchScalarGridSpec(
        num_scalar_prefetch=1,                  # seed lands in SMEM
        grid=grid,
        in_specs=[pl.BlockSpec((row_tile, cols), lambda i, seed: (i, 0))],
        out_specs=pl.BlockSpec((row_tile, cols), lambda i, seed: (i, 0)),
    )

    out2d = pl.pallas_call(
        kernel,
        out_shape=jax.ShapeDtypeStruct((rows, cols), x2d.dtype),
        grid_spec=grid_spec,
        compiler_params=pltpu.CompilerParams(
            dimension_semantics=("parallel",),   # rows independent -> 2 TCs on v7x
            vmem_limit_bytes=_VMEM_LIMIT_BYTES),
    )(seed_arr, x2d)

    return out2d.reshape(orig_shape)


if __name__ == "__main__":
    key = jax.random.PRNGKey(0)
    B, S, H = 2, 8, 32
    x = jax.random.normal(key, (B, S, H), dtype=jnp.float32)

    drop_prob = 0.1

    # Training path (dropout applied inside the Pallas kernel).
    y = stable_dropout(x, drop_prob, seed=1234, training=True)
    y = jax.block_until_ready(y)

    # Sanity: every output element is either 0 or x * 1/(1-p).
    scale = 1.0 / (1.0 - drop_prob)
    is_zero = jnp.isclose(y, 0.0)
    is_scaled = jnp.isclose(y, x * scale, rtol=1e-5, atol=1e-5)
    assert bool(jnp.all(is_zero | is_scaled)), "dropout output mismatch"
    assert y.shape == x.shape and y.dtype == x.dtype

    # Loose statistical sanity on the drop fraction (p = 0.1, N = 512).
    drop_frac = float(jnp.mean(is_zero.astype(jnp.float32)))
    assert 0.01 < drop_frac < 0.30, f"suspicious drop fraction {drop_frac}"

    # Eval path is the identity (matches self.training == False).
    y_eval = stable_dropout(x, drop_prob, seed=1234, training=False)
    assert bool(jnp.all(y_eval == x))

    print("KERNEL_OK")
</pallas_src>

<mosaic_0001>
module attributes {stable_mosaic.version = 11 : i64} {
  func.func @_stable_dropout_kernel(%arg0: i32, %arg1: memref<1xi32, #tpu.memory_space<smem>>, %arg2: memref<1x512xf32, #tpu.memory_space<vmem>>, %arg3: memref<1x512xf32, #tpu.memory_space<vmem>>) attributes {dimension_semantics = [#tpu.dimension_semantics<parallel>], iteration_bounds = array<i64: 1>, scalar_prefetch = 1 : i64, scratch_operands = 0 : i64, tpu.core_type = #tpu.core_type<tc>, window_params = [{transform_indices = @transform_0, window_bounds = array<i64: 1, 512>}, {transform_indices = @transform_1, window_bounds = array<i64: 1, 512>}]} {
    %0 = tpu.iota {dimensions = array<i32: 0>} : vector<1x512xi32>
    %1 = tpu.iota {dimensions = array<i32: 1>} : vector<1x512xi32>
    %c512_i32 = arith.constant 512 : i32
    %2 = arith.muli %arg0, %c512_i32 : i32
    %c512_i32_0 = arith.constant 512 : i32
    %3 = vector.broadcast %c512_i32_0 : i32 to vector<1x512xi32>
    %4 = arith.muli %0, %3 : vector<1x512xi32>
    %5 = vector.broadcast %2 : i32 to vector<1x512xi32>
    %6 = arith.addi %5, %4 : vector<1x512xi32>
    %7 = arith.addi %6, %1 : vector<1x512xi32>
    %c0 = arith.constant 0 : index
    %8 = memref.load %arg1[%c0] : memref<1xi32, #tpu.memory_space<smem>>
    %c-1640531527_i32 = arith.constant -1640531527 : i32
    %9 = arith.muli %8, %c-1640531527_i32 : i32
    %10 = vector.broadcast %9 : i32 to vector<1x512xi32>
    %11 = arith.addi %7, %10 : vector<1x512xi32>
    %c16_i32 = arith.constant 16 : i32
    %12 = vector.broadcast %c16_i32 : i32 to vector<1x512xi32>
    %13 = arith.shrsi %11, %12 : vector<1x512xi32>
    %c65535_i32 = arith.constant 65535 : i32
    %14 = vector.broadcast %c65535_i32 : i32 to vector<1x512xi32>
    %15 = arith.andi %13, %14 : vector<1x512xi32>
    %16 = arith.xori %11, %15 : vector<1x512xi32>
    %c-2048144789_i32 = arith.constant -2048144789 : i32
    %17 = vector.broadcast %c-2048144789_i32 : i32 to vector<1x512xi32>
    %18 = arith.muli %16, %17 : vector<1x512xi32>
    %c13_i32 = arith.constant 13 : i32
    %19 = vector.broadcast %c13_i32 : i32 to vector<1x512xi32>
    %20 = arith.shrsi %18, %19 : vector<1x512xi32>
    %c524287_i32 = arith.constant 524287 : i32
    %21 = vector.broadcast %c524287_i32 : i32 to vector<1x512xi32>
    %22 = arith.andi %20, %21 : vector<1x512xi32>
    %23 = arith.xori %18, %22 : vector<1x512xi32>
    %c-1028477387_i32 = arith.constant -1028477387 : i32
    %24 = vector.broadcast %c-1028477387_i32 : i32 to vector<1x512xi32>
    %25 = arith.muli %23, %24 : vector<1x512xi32>
    %c16_i32_1 = arith.constant 16 : i32
    %26 = vector.broadcast %c16_i32_1 : i32 to vector<1x512xi32>
    %27 = arith.shrsi %25, %26 : vector<1x512xi32>
    %c65535_i32_2 = arith.constant 65535 : i32
    %28 = vector.broadcast %c65535_i32_2 : i32 to vector<1x512xi32>
    %29 = arith.andi %27, %28 : vector<1x512xi32>
    %30 = arith.xori %25, %29 : vector<1x512xi32>
    %c2147483647_i32 = arith.constant 2147483647 : i32
    %31 = vector.broadcast %c2147483647_i32 : i32 to vector<1x512xi32>
    %32 = arith.andi %30, %31 : vector<1x512xi32>
    %c214748365_i32 = arith.constant 214748365 : i32
    %33 = vector.broadcast %c214748365_i32 : i32 to vector<1x512xi32>
    %34 = arith.cmpi sge, %32, %33 : vector<1x512xi32>
    %c0_3 = arith.constant 0 : index
    %c0_4 = arith.constant 0 : index
    %35 = vector.load %arg2[%c0_3, %c0_4] : memref<1x512xf32, #tpu.memory_space<vmem>>, vector<1x512xf32>
    %cst = arith.constant 1.11111116 : f32
    %36 = vector.broadcast %cst : f32 to vector<1x512xf32>
    %37 = arith.mulf %35, %36 : vector<1x512xf32>
    %cst_5 = arith.constant 0.000000e+00 : f32
    %38 = vector.broadcast %cst_5 : f32 to vector<1x512xf32>
    %39 = arith.select %34, %37, %38 : vector<1x512xi1>, vector<1x512xf32>
    %c0_6 = arith.constant 0 : index
    %c0_7 = arith.constant 0 : index
    %40 = vector.load %arg3[%c0_6, %c0_7] : memref<1x512xf32, #tpu.memory_space<vmem>>, vector<1x512xf32>
    tpu.vector_store %arg3[%c0_6, %c0_7], %39 {strides = array<i32>} : memref<1x512xf32, #tpu.memory_space<vmem>>, vector<1x512xf32>,
    return
  }
  func.func @transform_0(%arg0: i32, %arg1: memref<1xi32, #tpu.memory_space<smem>>) -> (i32, i32) {
    %c0_i32 = arith.constant 0 : i32
    %c0_i32_0 = arith.constant 0 : i32
    return %arg0, %c0_i32 : i32, i32
  }
  func.func @transform_1(%arg0: i32, %arg1: memref<1xi32, #tpu.memory_space<smem>>) -> (i32, i32) {
    %c0_i32 = arith.constant 0 : i32
    %c0_i32_0 = arith.constant 0 : i32
    return %arg0, %c0_i32 : i32, i32
  }
}

</mosaic_0001>

<llo_original>
// kernel: tpu_custom_call.1
$region0: #{tpu_custom_call.1}
  #allocation0 [shape = 'u32[]', space=smem, size = 0x4, offset = 0x4, fixed_abs, tag = 'smem constant byte address 0x4 - core index']
  #allocation1 [shape = 'u32[72,128]{1,0:T(1,128)}', space=vmem, size = 0x9000, scoped, tag = 'internal scratch']
  #allocation2 [shape = 's32[1]{0}', space=sflag, size = 0x4, scoped, tag = 'scoped memory for tpu_custom_call.1']
  #allocation3 [shape = 's32[1]{0:T(128)S(6)}', space=smem, size = 0x200, scoped, tag = 'prefetched SMEM operand 0']
  %s0 = inlined_call_operand.<no memory space> [shape: s32[1], index: 0, kind: input, shape index: {}]
  %s1 = inlined_call_operand.hbm [shape: f32[1,512], index: 1, kind: input, shape index: {}]
  %s2 = inlined_call_operand.hbm [shape: f32[1,512], index: 2, kind: output, shape index: {}]
  %s3 = sld [smem:[#allocation0]]
  $region18: #{tpu_custom_call.1} parent=0
    _
  %s5 = ssub.s32 1, %s3
  %s6 = scalar_select 0, %s5, %s3
  %7 = sst [smem:[#allocation3]] %s0
  $region1: #{tpu_custom_call.1} parent=0
    #allocation4 [shape = 'u8[2048]{0}', space=vmem, size = 0x800, scoped, tag = 'input window, operand 1, single buffered']
    #allocation5 [shape = 's32[1]{0}', space=sflag, size = 0x4, scoped, tag = 'scoped memory for tpu_custom_call.1']
    #allocation6 [shape = 's32[1]{0}', space=sflag, size = 0x4, scoped, tag = 'scoped memory for tpu_custom_call.1']
    #allocation7 [shape = 'u8[2048]{0}', space=vmem, size = 0x800, scoped, tag = 'output window, operand 0, single buffered']
    %8 = vsyncpa [#allocation5], 0
    %9 = vsyncpa [#allocation6], 0
    // Predicated region
    $region2: #{tpu_custom_call.1} parent=1 // pred_check
      _
    $region3: #{tpu_custom_call.1} parent=1 // pred_check_branch
      %11 = sbr.rel (0) target = $region5
    $region4: #{tpu_custom_call.1} parent=1 // pred_region
      %13 = vsyncadd [#allocation5], 0
      %s15 = sshll.u32 %s1, 4
      %s16 = int_to_ptr.hbm [resolvable:$true] %s15
      %s17 = sshll.u32 [#allocation4], 4
      %s18 = int_to_ptr.vmem [resolvable:$true] %s17
      %20 = dma.hbm_to_vmem [thread:$0]  %s16, 64, %s18, [#allocation5]
    $region5: #{tpu_custom_call.1} parent=1 // pred_fallthru
      _
    // Predicated region
    $region6: #{tpu_custom_call.1} parent=1 // pred_check
      _
    $region7: #{tpu_custom_call.1} parent=1 // pred_check_branch
      %22 = sbr.rel (0) target = $region9
    $region8: #{tpu_custom_call.1} parent=1 // pred_region
      %24 = dma.done [#allocation5], 64
    $region9: #{tpu_custom_call.1} parent=1 // pred_fallthru
      _
    %v25 = vlaneseq
    %v26 = vshrl.u32 %v25, 7
    %v27 = vlaneseq
    %v28 = vand.u32 %v27, 127
    %v29 = vadd.s32 %v28, 128
    %v30 = vadd.s32 %v28, 256
    %v31 = vadd.s32 %v28, 384
    %s32 = smul.u32 0, 512
    %v33 = vmul.u32 %v26, 512
    %v34 = vstv %s32
    %v35 = vadd.s32 %v34, %v33
    %v36 = vadd.s32 %v35, %v28
    %v37 = vadd.s32 %v35, %v29
    %v38 = vadd.s32 %v35, %v30
    %v39 = vadd.s32 %v35, %v31
    %s40 = sld [smem:[#allocation3]]
    %s41 = smul.u32 %s40, 2654435769
    %v42 = vstv %s41
    %v43 = vadd.s32 %v36, %v42
    %v44 = vadd.s32 %v37, %v42
    %v45 = vadd.s32 %v38, %v42
    %v46 = vadd.s32 %v39, %v42
    %v47 = vshra.s32 %v43, 16
    %v48 = vshra.s32 %v44, 16
    %v49 = vshra.s32 %v45, 16
    %v50 = vshra.s32 %v46, 16
    %v51 = vand.u32 %v47, 65535
    %v52 = vand.u32 %v48, 65535
    %v53 = vand.u32 %v49, 65535
    %v54 = vand.u32 %v50, 65535
    %v55 = vxor.u32 %v43, %v51
    %v56 = vxor.u32 %v44, %v52
    %v57 = vxor.u32 %v45, %v53
    %v58 = vxor.u32 %v46, %v54
    %v59 = vmul.u32 %v55, 2246822507
    %v60 = vmul.u32 %v56, 2246822507
    %v61 = vmul.u32 %v57, 2246822507
    %v62 = vmul.u32 %v58, 2246822507
    %v63 = vshra.s32 %v59, 13
    %v64 = vshra.s32 %v60, 13
    %v65 = vshra.s32 %v61, 13
    %v66 = vshra.s32 %v62, 13
    %v67 = vand.u32 %v63, 524287
    %v68 = vand.u32 %v64, 524287
    %v69 = vand.u32 %v65, 524287
    %v70 = vand.u32 %v66, 524287
    %v71 = vxor.u32 %v59, %v67
    %v72 = vxor.u32 %v60, %v68
    %v73 = vxor.u32 %v61, %v69
    %v74 = vxor.u32 %v62, %v70
    %v75 = vmul.u32 %v71, 3266489909
    %v76 = vmul.u32 %v72, 3266489909
    %v77 = vmul.u32 %v73, 3266489909
    %v78 = vmul.u32 %v74, 3266489909
    %v79 = vshra.s32 %v75, 16
    %v80 = vshra.s32 %v76, 16
    %v81 = vshra.s32 %v77, 16
    %v82 = vshra.s32 %v78, 16
    %v83 = vand.u32 %v79, 65535
    %v84 = vand.u32 %v80, 65535
    %v85 = vand.u32 %v81, 65535
    %v86 = vand.u32 %v82, 65535
    %v87 = vxor.u32 %v75, %v83
    %v88 = vxor.u32 %v76, %v84
    %v89 = vxor.u32 %v77, %v85
    %v90 = vxor.u32 %v78, %v86
    %v91 = vand.u32 %v87, 2147483647
    %v92 = vand.u32 %v88, 2147483647
    %v93 = vand.u32 %v89, 2147483647
    %v94 = vand.u32 %v90, 2147483647
    %vm95 = vcmp.ge.s32.totalorder %v91, 214748365
    %vm96 = vcmp.ge.s32.totalorder %v92, 214748365
    %vm97 = vcmp.ge.s32.totalorder %v93, 214748365
    %vm98 = vcmp.ge.s32.totalorder %v94, 214748365
    %v99 = vld [vmem:[#allocation4] sm:$0xf]
    %v100 = vmul.f32 %v99, 1.1111112
    %v102 = vperm.slane %v100, 0
    %v103 = vperm.slane %v100, 1
    %v104 = vperm.slane %v100, 2
    %v105 = vperm.slane %v100, 3
    %v110 = vsel %vm95, %v102, 0.0
    %v111 = vsel %vm96, %v103, 0.0
    %v112 = vsel %vm97, %v104, 0.0
    %v113 = vsel %vm98, %v105, 0.0
    %v118 = vrot.slane %v111, 7
    %v119 = vrot.slane %v112, 6
    %v120 = vrot.slane %v113, 5
    %vm121 = vcmask 1040384
    %v122 = vsel %vm121, %v110, %v118
    %vm123 = vcmask 1042434
    %v124 = vsel %vm123, %v119, %v120
    %vm125 = vcmask 1041408
    %v126 = vsel %vm125, %v122, %v124
    %v128 = vlaneseq
    %vm129 = vcmp.ge.s32.totalorder %v128, 0
    %vm130 = vcmp.lt.s32.totalorder %v128, 512
    %vm131 = vmand %vm129, %vm130
    %132 = vst.msk [vmem:[#allocation7] sm:$0xf] %vm131, %v126
    // Predicated region
    $region10: #{tpu_custom_call.1} parent=1 // pred_check
      _
    $region11: #{tpu_custom_call.1} parent=1 // pred_check_branch
      %134 = sbr.rel (0) target = $region13
    $region12: #{tpu_custom_call.1} parent=1 // pred_region
      %136 = vsyncadd [#allocation6], 0
      %s138 = sshll.u32 [#allocation7], 4
      %s139 = int_to_ptr.vmem [resolvable:$true] %s138
      %s140 = sshll.u32 %s2, 4
      %s141 = int_to_ptr.hbm [resolvable:$true] %s140
      %143 = dma.vmem_to_hbm [thread:$0]  %s139, 64, %s141, [#allocation6]
    $region13: #{tpu_custom_call.1} parent=1 // pred_fallthru
      _
    // Predicated region
    $region14: #{tpu_custom_call.1} parent=1 // pred_check
      _
    $region15: #{tpu_custom_call.1} parent=1 // pred_check_branch
      %145 = sbr.rel (0) target = $region17
    $region16: #{tpu_custom_call.1} parent=1 // pred_region
      %147 = dma.done [#allocation6], 64
    $region17: #{tpu_custom_call.1} parent=1 // pred_fallthru
      _
    %148 = vsyncpa [#allocation5], 1
    %149 = vsyncpa [#allocation6], 1

</llo_original>
